<compile_context>
chip_gen: v5e
topology: v5e:2x2
jax: 0.10.0
libtpu: 0.0.40
codegen_flags: <defaults>
</compile_context>

<pallas_src>
import math
import jax
import jax.numpy as jnp
from jax.experimental import pallas as pl
from jax.experimental.pallas import tpu as pltpu

# --- model dims (small, consistent with the module) ---
B = 2
S = 8
D_MODEL = 32
N_HEADS = 4
D_K = D_MODEL // N_HEADS
D_FF = 64
EPS = 1e-6          # LayerNormalization eps (added to std, not variance)
NEG_INF = -1e9


def _layernorm(x, alpha, bias):
    # matches the PyTorch LayerNormalization: torch.std is *unbiased* (ddof=1),
    # eps is added to std, alpha/bias are scalars.
    mean = jnp.mean(x, axis=-1, keepdims=True)
    var = jnp.sum((x - mean) ** 2, axis=-1, keepdims=True) / (x.shape[-1] - 1)
    std = jnp.sqrt(var)
    return alpha * (x - mean) / (std + EPS) + bias


def encoder_block_kernel(ln_ref,      # SMEM (4,): [a1, b1, a2, b2]
                         x_ref,       # (B*S, D)
                         bias_ref,    # (B*S, B*S) additive attention bias
                         w_ref,       # (D, 3D + D + D_FF) = [wq*s|wk|wv|wo|w1]
                         b_ref,       # (1, 3D + D + D_FF + D) = [bq*s|bk|bv|bo|b1|b2]
                         w2_ref,      # (D_FF, D)
                         o_ref):      # (B*S, D)
    x = x_ref[...].astype(jnp.float32)                 # (16, 32)

    a1 = ln_ref[0]
    c1 = ln_ref[1]
    a2 = ln_ref[2]
    c2 = ln_ref[3]

    # ---- residual connection 0: self-attention on pre-norm input ----
    xn = _layernorm(x, a1, c1)                          # (16, 32)

    wqkv = w_ref[:, 0:3 * D_MODEL]                      # (32, 96)  static ref slice
    bqkv = b_ref[:, 0:3 * D_MODEL]                      # (1, 96)
    qkv = jnp.dot(xn, wqkv, preferred_element_type=jnp.float32) + bqkv   # (16, 96)

    # head-batched layout: (3H, B*S, d_k); 1/sqrt(d_k) already folded into wq/bq
    heads = jnp.stack(
        [qkv[:, i * D_K:(i + 1) * D_K] for i in range(3 * N_HEADS)], axis=0)  # (12,16,8)
    qh = heads[0:N_HEADS]                               # (4, 16, 8)
    kh = heads[N_HEADS:2 * N_HEADS]                     # (4, 16, 8)
    vh = heads[2 * N_HEADS:3 * N_HEADS]                 # (4, 16, 8)

    # one batched score matmul over all heads; cross-batch / masked-key entries
    # are suppressed by the precomputed additive bias (exp underflows to 0).
    scores = jnp.einsum('hrd,hcd->hrc', qh, kh,
                        preferred_element_type=jnp.float32)      # (4, 16, 16)
    scores = scores + bias_ref[...]                               # broadcast over h
    scores = scores - jnp.max(scores, axis=-1, keepdims=True)
    p = jnp.exp(scores)
    p = p * (1.0 / jnp.sum(p, axis=-1, keepdims=True))            # exact reciprocal
    oh = jnp.einsum('hrc,hcd->hrd', p, vh,
                    preferred_element_type=jnp.float32)           # (4, 16, 8)

    # fold heads into the Wo projection (no lane concat): sum_h oh_h @ wo_h
    wo_h = w_ref[:, 3 * D_MODEL:4 * D_MODEL].reshape(N_HEADS, D_K, D_MODEL)  # (4,8,32)
    attn = jnp.sum(
        jnp.einsum('hrd,hde->hre', oh, wo_h, preferred_element_type=jnp.float32),
        axis=0) + b_ref[:, 3 * D_MODEL:4 * D_MODEL]               # (16, 32)
    x1 = x + attn                                                 # residual add

    # ---- residual connection 1: feed-forward on pre-norm input ----
    xn2 = _layernorm(x1, a2, c2)
    w1 = w_ref[:, 4 * D_MODEL:4 * D_MODEL + D_FF]                 # (32, 64)
    b1 = b_ref[:, 4 * D_MODEL:4 * D_MODEL + D_FF]                 # (1, 64)
    b2 = b_ref[:, 4 * D_MODEL + D_FF:4 * D_MODEL + D_FF + D_MODEL]  # (1, 32)
    h1 = jnp.maximum(
        jnp.dot(xn2, w1, preferred_element_type=jnp.float32) + b1, 0.0)     # (16, 64)
    ff = jnp.dot(h1, w2_ref[...], preferred_element_type=jnp.float32) + b2  # (16, 32)

    o_ref[...] = (x1 + ff).astype(o_ref.dtype)


def encoder_block(x, mask, params):
    Bx, Sx, Dx = x.shape
    x_flat = x.reshape(Bx * Sx, Dx)                     # wrapper-side reshape (free)

    # fold the attention scale into the Q projection (free: fuses into the concat)
    scale = 1.0 / math.sqrt(D_K)
    wq = params["wq"] * scale
    bq = params["bq"] * scale

    # packed weights: [wq*s | wk | wv | wo | w1] -> (D, 192); biases -> (1, 224)
    w_big = jnp.concatenate(
        [wq, params["wk"], params["wv"], params["wo"], params["w1"]], axis=1)
    b_big = jnp.concatenate(
        [bq, params["bk"], params["bv"], params["bo"], params["b1"], params["b2"]],
        axis=1)

    # additive bias over the flattened (B*S, B*S) score matrix:
    #   0     where query row may attend key col (same batch & key unmasked)
    #   -1e9  otherwise (cross-batch or masked key)
    mask_b = jnp.broadcast_to(mask, (Bx, Sx, Sx)).astype(jnp.float32)
    add = jnp.where(mask_b == 0.0, NEG_INF, 0.0)                        # (B, S, S)
    same_b = (jnp.arange(Bx)[:, None, None, None]
              == jnp.arange(Bx)[None, None, :, None])                   # (B,1,B,1)
    bias = jnp.where(same_b, add[:, :, None, :], NEG_INF).reshape(Bx * Sx, Bx * Sx)

    vmem = pl.BlockSpec(memory_space=pltpu.MemorySpace.VMEM)   # whole-array resident
    smem = pl.BlockSpec(memory_space=pltpu.MemorySpace.SMEM)   # scalar LN params

    out_flat = pl.pallas_call(
        encoder_block_kernel,
        out_shape=jax.ShapeDtypeStruct((Bx * Sx, Dx), x.dtype),
        in_specs=[smem,                # ln params
                  vmem,                # x (flat)
                  vmem,                # additive attention bias
                  vmem,                # packed weights
                  vmem,                # packed biases
                  vmem],               # w2
        out_specs=vmem,
    )(params["ln"], x_flat, bias, w_big, b_big, params["w2"])

    return out_flat.reshape(Bx, Sx, Dx)


# ---------- pure-JAX reference (mirrors the PyTorch forward) ----------
def reference(x, mask, params):
    def ln(z, a, c):
        mean = z.mean(-1, keepdims=True)
        var = ((z - mean) ** 2).sum(-1, keepdims=True) / (z.shape[-1] - 1)
        return a * (z - mean) / (jnp.sqrt(var) + EPS) + c

    a1, c1, a2, c2 = [params["ln"][i] for i in range(4)]
    xn = ln(x, a1, c1)
    q = xn @ params["wq"] + params["bq"]
    k = xn @ params["wk"] + params["bk"]
    v = xn @ params["wv"] + params["bv"]
    q = q.reshape(B, S, N_HEADS, D_K).transpose(0, 2, 1, 3)
    k = k.reshape(B, S, N_HEADS, D_K).transpose(0, 2, 1, 3)
    v = v.reshape(B, S, N_HEADS, D_K).transpose(0, 2, 1, 3)
    scores = jnp.einsum("bhqd,bhkd->bhqk", q, k) / math.sqrt(D_K)
    scores = jnp.where(mask[:, None, :, :] == 0.0, NEG_INF, scores)
    p = jax.nn.softmax(scores, axis=-1)
    o = jnp.einsum("bhqk,bhkd->bhqd", p, v).transpose(0, 2, 1, 3).reshape(B, S, D_MODEL)
    x1 = x + (o @ params["wo"] + params["bo"])
    xn2 = ln(x1, a2, c2)
    ff = jnp.maximum(xn2 @ params["w1"] + params["b1"], 0.0) @ params["w2"] + params["b2"]
    return x1 + ff


if __name__ == "__main__":
    key = jax.random.PRNGKey(0)
    keys = jax.random.split(key, 13)

    def init(k, shape, scale=0.1):
        return jax.random.normal(k, shape, dtype=jnp.float32) * scale

    params = {
        "ln": jnp.array([1.0, 0.0, 1.0, 0.0], dtype=jnp.float32),  # alpha/bias init
        "wq": init(keys[0], (D_MODEL, D_MODEL)), "bq": init(keys[1], (1, D_MODEL)),
        "wk": init(keys[2], (D_MODEL, D_MODEL)), "bk": init(keys[3], (1, D_MODEL)),
        "wv": init(keys[4], (D_MODEL, D_MODEL)), "bv": init(keys[5], (1, D_MODEL)),
        "wo": init(keys[6], (D_MODEL, D_MODEL)), "bo": init(keys[7], (1, D_MODEL)),
        "w1": init(keys[8], (D_MODEL, D_FF)),    "b1": init(keys[9], (1, D_FF)),
        "w2": init(keys[10], (D_FF, D_MODEL)),   "b2": init(keys[11], (1, D_MODEL)),
    }

    x = jax.random.normal(keys[12], (B, S, D_MODEL), dtype=jnp.float32)

    # padding-style mask: batch 0 attends all 8 positions, batch 1 only first 6
    lengths = jnp.array([8, 6])
    valid = (jnp.arange(S)[None, :] < lengths[:, None]).astype(jnp.float32)  # (B, S)
    mask = jnp.broadcast_to(valid[:, None, :], (B, S, S)).astype(jnp.float32)

    out = encoder_block(x, mask, params)
    out = jax.block_until_ready(out)

    ref = reference(x, mask, params)
    assert out.shape == (B, S, D_MODEL)
    assert jnp.allclose(out, ref, rtol=1e-4, atol=1e-4), (
        f"max abs diff {jnp.max(jnp.abs(out - ref))}")

    print("KERNEL_OK")
</pallas_src>

<mosaic_0001>
module attributes {stable_mosaic.version = 11 : i64} {
  func.func @encoder_block_kernel(%arg0: memref<4xf32, #tpu.memory_space<smem>>, %arg1: memref<16x32xf32, #tpu.memory_space<vmem>>, %arg2: memref<16x16xf32, #tpu.memory_space<vmem>>, %arg3: memref<32x192xf32, #tpu.memory_space<vmem>>, %arg4: memref<1x224xf32, #tpu.memory_space<vmem>>, %arg5: memref<64x32xf32, #tpu.memory_space<vmem>>, %arg6: memref<16x32xf32, #tpu.memory_space<vmem>>) attributes {dimension_semantics = [], scalar_prefetch = 0 : i64, scratch_operands = 0 : i64, tpu.core_type = #tpu.core_type<tc>} {
    %c0 = arith.constant 0 : index
    %c0_0 = arith.constant 0 : index
    %0 = vector.load %arg1[%c0, %c0_0] : memref<16x32xf32, #tpu.memory_space<vmem>>, vector<16x32xf32>
    %c0_1 = arith.constant 0 : index
    %1 = memref.load %arg0[%c0_1] : memref<4xf32, #tpu.memory_space<smem>>
    %c1 = arith.constant 1 : index
    %2 = memref.load %arg0[%c1] : memref<4xf32, #tpu.memory_space<smem>>
    %c2 = arith.constant 2 : index
    %3 = memref.load %arg0[%c2] : memref<4xf32, #tpu.memory_space<smem>>
    %c3 = arith.constant 3 : index
    %4 = memref.load %arg0[%c3] : memref<4xf32, #tpu.memory_space<smem>>
    %cst = arith.constant dense<0.000000e+00> : vector<16xf32>
    %5 = vector.multi_reduction <add>, %0, %cst [1] : vector<16x32xf32> to vector<16xf32>
    %6 = vector.shape_cast %5 : vector<16xf32> to vector<16x1xf32>
    %cst_2 = arith.constant 3.200000e+01 : f32
    %7 = vector.broadcast %cst_2 : f32 to vector<16x1xf32>
    %8 = arith.divf %6, %7 : vector<16x1xf32>
    %9 = vector.broadcast %8 : vector<16x1xf32> to vector<16x32xf32>
    %10 = arith.subf %0, %9 : vector<16x32xf32>
    %11 = arith.mulf %10, %10 : vector<16x32xf32>
    %cst_3 = arith.constant dense<0.000000e+00> : vector<16xf32>
    %12 = vector.multi_reduction <add>, %11, %cst_3 [1] : vector<16x32xf32> to vector<16xf32>
    %13 = vector.shape_cast %12 : vector<16xf32> to vector<16x1xf32>
    %cst_4 = arith.constant 3.100000e+01 : f32
    %14 = vector.broadcast %cst_4 : f32 to vector<16x1xf32>
    %15 = arith.divf %13, %14 : vector<16x1xf32>
    %16 = math.sqrt %15 : vector<16x1xf32>
    %17 = vector.broadcast %8 : vector<16x1xf32> to vector<16x32xf32>
    %18 = arith.subf %0, %17 : vector<16x32xf32>
    %19 = vector.broadcast %1 : f32 to vector<16x32xf32>
    %20 = arith.mulf %19, %18 : vector<16x32xf32>
    %cst_5 = arith.constant 9.99999997E-7 : f32
    %21 = vector.broadcast %cst_5 : f32 to vector<16x1xf32>
    %22 = arith.addf %16, %21 : vector<16x1xf32>
    %23 = vector.broadcast %22 : vector<16x1xf32> to vector<16x32xf32>
    %24 = arith.divf %20, %23 : vector<16x32xf32>
    %25 = vector.broadcast %2 : f32 to vector<16x32xf32>
    %26 = arith.addf %24, %25 : vector<16x32xf32>
    %c0_6 = arith.constant 0 : index
    %c0_7 = arith.constant 0 : index
    %27 = vector.load %arg3[%c0_6, %c0_7] : memref<32x192xf32, #tpu.memory_space<vmem>>, vector<32x96xf32>
    %c0_8 = arith.constant 0 : index
    %c0_9 = arith.constant 0 : index
    %28 = vector.load %arg4[%c0_8, %c0_9] : memref<1x224xf32, #tpu.memory_space<vmem>>, vector<1x96xf32>
    %cst_10 = arith.constant dense<0.000000e+00> : vector<16x96xf32>
    %29 = tpu.matmul %26, %27, %cst_10 {dimension_numbers = #tpu.dot_dimension_numbers<[1], [0], [0], [1], [0, 0, 1, 1], [], []>} : vector<16x32xf32>, vector<32x96xf32>, vector<16x96xf32> -> vector<16x96xf32>
    %30 = vector.broadcast %28 : vector<1x96xf32> to vector<16x96xf32>
    %31 = arith.addf %29, %30 : vector<16x96xf32>
    %32 = vector.extract_strided_slice %31 {offsets = [0, 0], sizes = [16, 8], strides = [1, 1]} : vector<16x96xf32> to vector<16x8xf32>
    %33 = vector.extract_strided_slice %31 {offsets = [0, 8], sizes = [16, 8], strides = [1, 1]} : vector<16x96xf32> to vector<16x8xf32>
    %34 = vector.extract_strided_slice %31 {offsets = [0, 16], sizes = [16, 8], strides = [1, 1]} : vector<16x96xf32> to vector<16x8xf32>
    %35 = vector.extract_strided_slice %31 {offsets = [0, 24], sizes = [16, 8], strides = [1, 1]} : vector<16x96xf32> to vector<16x8xf32>
    %36 = vector.extract_strided_slice %31 {offsets = [0, 32], sizes = [16, 8], strides = [1, 1]} : vector<16x96xf32> to vector<16x8xf32>
    %37 = vector.extract_strided_slice %31 {offsets = [0, 40], sizes = [16, 8], strides = [1, 1]} : vector<16x96xf32> to vector<16x8xf32>
    %38 = vector.extract_strided_slice %31 {offsets = [0, 48], sizes = [16, 8], strides = [1, 1]} : vector<16x96xf32> to vector<16x8xf32>
    %39 = vector.extract_strided_slice %31 {offsets = [0, 56], sizes = [16, 8], strides = [1, 1]} : vector<16x96xf32> to vector<16x8xf32>
    %40 = vector.extract_strided_slice %31 {offsets = [0, 64], sizes = [16, 8], strides = [1, 1]} : vector<16x96xf32> to vector<16x8xf32>
    %41 = vector.extract_strided_slice %31 {offsets = [0, 72], sizes = [16, 8], strides = [1, 1]} : vector<16x96xf32> to vector<16x8xf32>
    %42 = vector.extract_strided_slice %31 {offsets = [0, 80], sizes = [16, 8], strides = [1, 1]} : vector<16x96xf32> to vector<16x8xf32>
    %43 = vector.extract_strided_slice %31 {offsets = [0, 88], sizes = [16, 8], strides = [1, 1]} : vector<16x96xf32> to vector<16x8xf32>
    %44 = vector.shape_cast %32 : vector<16x8xf32> to vector<1x16x8xf32>
    %45 = vector.shape_cast %33 : vector<16x8xf32> to vector<1x16x8xf32>
    %46 = vector.shape_cast %34 : vector<16x8xf32> to vector<1x16x8xf32>
    %47 = vector.shape_cast %35 : vector<16x8xf32> to vector<1x16x8xf32>
    %48 = vector.shape_cast %36 : vector<16x8xf32> to vector<1x16x8xf32>
    %49 = vector.shape_cast %37 : vector<16x8xf32> to vector<1x16x8xf32>
    %50 = vector.shape_cast %38 : vector<16x8xf32> to vector<1x16x8xf32>
    %51 = vector.shape_cast %39 : vector<16x8xf32> to vector<1x16x8xf32>
    %52 = vector.shape_cast %40 : vector<16x8xf32> to vector<1x16x8xf32>
    %53 = vector.shape_cast %41 : vector<16x8xf32> to vector<1x16x8xf32>
    %54 = vector.shape_cast %42 : vector<16x8xf32> to vector<1x16x8xf32>
    %55 = vector.shape_cast %43 : vector<16x8xf32> to vector<1x16x8xf32>
    %56 = tpu.concatenate %44, %45, %46, %47, %48, %49, %50, %51, %52, %53, %54, %55 in 0 : vector<1x16x8xf32>, vector<1x16x8xf32>, vector<1x16x8xf32>, vector<1x16x8xf32>, vector<1x16x8xf32>, vector<1x16x8xf32>, vector<1x16x8xf32>, vector<1x16x8xf32>, vector<1x16x8xf32>, vector<1x16x8xf32>, vector<1x16x8xf32>, vector<1x16x8xf32> -> vector<12x16x8xf32>
    %57 = vector.extract_strided_slice %56 {offsets = [0, 0, 0], sizes = [4, 16, 8], strides = [1, 1, 1]} : vector<12x16x8xf32> to vector<4x16x8xf32>
    %58 = vector.extract_strided_slice %56 {offsets = [4, 0, 0], sizes = [4, 16, 8], strides = [1, 1, 1]} : vector<12x16x8xf32> to vector<4x16x8xf32>
    %59 = vector.extract_strided_slice %56 {offsets = [8, 0, 0], sizes = [4, 16, 8], strides = [1, 1, 1]} : vector<12x16x8xf32> to vector<4x16x8xf32>
    "tpu.trace_start"() <{level = 10 : i32, message = "hrd,hcd->hrc"}> : () -> ()
    %cst_11 = arith.constant dense<0.000000e+00> : vector<4x16x16xf32>
    %60 = tpu.matmul %57, %58, %cst_11 {dimension_numbers = #tpu.dot_dimension_numbers<[2], [2], [1], [1], [0, 0, 0, 1, 1, 1], [0], [0]>} : vector<4x16x8xf32>, vector<4x16x8xf32>, vector<4x16x16xf32> -> vector<4x16x16xf32>
    "tpu.trace_stop"() : () -> ()
    %c0_12 = arith.constant 0 : index
    %c0_13 = arith.constant 0 : index
    %61 = vector.load %arg2[%c0_12, %c0_13] : memref<16x16xf32, #tpu.memory_space<vmem>>, vector<16x16xf32>
    %62 = vector.shape_cast %61 : vector<16x16xf32> to vector<1x16x16xf32>
    %63 = vector.broadcast %62 : vector<1x16x16xf32> to vector<4x16x16xf32>
    %64 = arith.addf %60, %63 : vector<4x16x16xf32>
    %cst_14 = arith.constant dense<0xFF800000> : vector<4x16xf32>
    %65 = vector.multi_reduction <maximumf>, %64, %cst_14 [2] : vector<4x16x16xf32> to vector<4x16xf32>
    %66 = vector.shape_cast %65 : vector<4x16xf32> to vector<4x16x1xf32>
    %67 = vector.broadcast %66 : vector<4x16x1xf32> to vector<4x16x16xf32>
    %68 = arith.subf %64, %67 : vector<4x16x16xf32>
    %69 = math.exp %68 : vector<4x16x16xf32>
    %cst_15 = arith.constant dense<0.000000e+00> : vector<4x16xf32>
    %70 = vector.multi_reduction <add>, %69, %cst_15 [2] : vector<4x16x16xf32> to vector<4x16xf32>
    %71 = vector.shape_cast %70 : vector<4x16xf32> to vector<4x16x1xf32>
    %cst_16 = arith.constant 1.000000e+00 : f32
    %72 = vector.broadcast %cst_16 : f32 to vector<4x16x1xf32>
    %73 = arith.divf %72, %71 : vector<4x16x1xf32>
    %74 = vector.broadcast %73 : vector<4x16x1xf32> to vector<4x16x16xf32>
    %75 = arith.mulf %69, %74 : vector<4x16x16xf32>
    "tpu.trace_start"() <{level = 10 : i32, message = "hrc,hcd->hrd"}> : () -> ()
    %cst_17 = arith.constant dense<0.000000e+00> : vector<4x16x8xf32>
    %76 = tpu.matmul %75, %59, %cst_17 {dimension_numbers = #tpu.dot_dimension_numbers<[2], [1], [1], [2], [0, 0, 0, 1, 1, 2], [0], [0]>} : vector<4x16x16xf32>, vector<4x16x8xf32>, vector<4x16x8xf32> -> vector<4x16x8xf32>
    "tpu.trace_stop"() : () -> ()
    %c0_18 = arith.constant 0 : index
    %c96 = arith.constant 96 : index
    %77 = vector.load %arg3[%c0_18, %c96] : memref<32x192xf32, #tpu.memory_space<vmem>>, vector<32x32xf32>
    %78 = vector.shape_cast %77 : vector<32x32xf32> to vector<4x8x32xf32>
    "tpu.trace_start"() <{level = 10 : i32, message = "hrd,hde->hre"}> : () -> ()
    %cst_19 = arith.constant dense<0.000000e+00> : vector<4x16x32xf32>
    %79 = tpu.matmul %76, %78, %cst_19 {dimension_numbers = #tpu.dot_dimension_numbers<[2], [1], [1], [2], [0, 0, 0, 1, 1, 2], [0], [0]>} : vector<4x16x8xf32>, vector<4x8x32xf32>, vector<4x16x32xf32> -> vector<4x16x32xf32>
    "tpu.trace_stop"() : () -> ()
    %cst_20 = arith.constant dense<0.000000e+00> : vector<16x32xf32>
    %80 = vector.multi_reduction <add>, %79, %cst_20 [0] : vector<4x16x32xf32> to vector<16x32xf32>
    %c0_21 = arith.constant 0 : index
    %c96_22 = arith.constant 96 : index
    %81 = vector.load %arg4[%c0_21, %c96_22] : memref<1x224xf32, #tpu.memory_space<vmem>>, vector<1x32xf32>
    %82 = vector.broadcast %81 : vector<1x32xf32> to vector<16x32xf32>
    %83 = arith.addf %80, %82 : vector<16x32xf32>
    %84 = arith.addf %0, %83 : vector<16x32xf32>
    %cst_23 = arith.constant dense<0.000000e+00> : vector<16xf32>
    %85 = vector.multi_reduction <add>, %84, %cst_23 [1] : vector<16x32xf32> to vector<16xf32>
    %86 = vector.shape_cast %85 : vector<16xf32> to vector<16x1xf32>
    %cst_24 = arith.constant 3.200000e+01 : f32
    %87 = vector.broadcast %cst_24 : f32 to vector<16x1xf32>
    %88 = arith.divf %86, %87 : vector<16x1xf32>
    %89 = vector.broadcast %88 : vector<16x1xf32> to vector<16x32xf32>
    %90 = arith.subf %84, %89 : vector<16x32xf32>
    %91 = arith.mulf %90, %90 : vector<16x32xf32>
    %cst_25 = arith.constant dense<0.000000e+00> : vector<16xf32>
    %92 = vector.multi_reduction <add>, %91, %cst_25 [1] : vector<16x32xf32> to vector<16xf32>
    %93 = vector.shape_cast %92 : vector<16xf32> to vector<16x1xf32>
    %cst_26 = arith.constant 3.100000e+01 : f32
    %94 = vector.broadcast %cst_26 : f32 to vector<16x1xf32>
    %95 = arith.divf %93, %94 : vector<16x1xf32>
    %96 = math.sqrt %95 : vector<16x1xf32>
    %97 = vector.broadcast %88 : vector<16x1xf32> to vector<16x32xf32>
    %98 = arith.subf %84, %97 : vector<16x32xf32>
    %99 = vector.broadcast %3 : f32 to vector<16x32xf32>
    %100 = arith.mulf %99, %98 : vector<16x32xf32>
    %cst_27 = arith.constant 9.99999997E-7 : f32
    %101 = vector.broadcast %cst_27 : f32 to vector<16x1xf32>
    %102 = arith.addf %96, %101 : vector<16x1xf32>
    %103 = vector.broadcast %102 : vector<16x1xf32> to vector<16x32xf32>
    %104 = arith.divf %100, %103 : vector<16x32xf32>
    %105 = vector.broadcast %4 : f32 to vector<16x32xf32>
    %106 = arith.addf %104, %105 : vector<16x32xf32>
    %c0_28 = arith.constant 0 : index
    %c128 = arith.constant 128 : index
    %107 = vector.load %arg3[%c0_28, %c128] : memref<32x192xf32, #tpu.memory_space<vmem>>, vector<32x64xf32>
    %c0_29 = arith.constant 0 : index
    %c128_30 = arith.constant 128 : index
    %108 = vector.load %arg4[%c0_29, %c128_30] : memref<1x224xf32, #tpu.memory_space<vmem>>, vector<1x64xf32>
    %c0_31 = arith.constant 0 : index
    %c192 = arith.constant 192 : index
    %109 = vector.load %arg4[%c0_31, %c192] : memref<1x224xf32, #tpu.memory_space<vmem>>, vector<1x32xf32>
    %cst_32 = arith.constant dense<0.000000e+00> : vector<16x64xf32>
    %110 = tpu.matmul %106, %107, %cst_32 {dimension_numbers = #tpu.dot_dimension_numbers<[1], [0], [0], [1], [0, 0, 1, 1], [], []>} : vector<16x32xf32>, vector<32x64xf32>, vector<16x64xf32> -> vector<16x64xf32>
    %111 = vector.broadcast %108 : vector<1x64xf32> to vector<16x64xf32>
    %112 = arith.addf %110, %111 : vector<16x64xf32>
    %cst_33 = arith.constant 0.000000e+00 : f32
    %113 = vector.broadcast %cst_33 : f32 to vector<16x64xf32>
    %114 = arith.maximumf %112, %113 : vector<16x64xf32>
    %c0_34 = arith.constant 0 : index
    %c0_35 = arith.constant 0 : index
    %115 = vector.load %arg5[%c0_34, %c0_35] : memref<64x32xf32, #tpu.memory_space<vmem>>, vector<64x32xf32>
    %cst_36 = arith.constant dense<0.000000e+00> : vector<16x32xf32>
    %116 = tpu.matmul %114, %115, %cst_36 {dimension_numbers = #tpu.dot_dimension_numbers<[1], [0], [0], [1], [0, 0, 1, 1], [], []>} : vector<16x64xf32>, vector<64x32xf32>, vector<16x32xf32> -> vector<16x32xf32>
    %117 = vector.broadcast %109 : vector<1x32xf32> to vector<16x32xf32>
    %118 = arith.addf %116, %117 : vector<16x32xf32>
    %119 = arith.addf %84, %118 : vector<16x32xf32>
    %c0_37 = arith.constant 0 : index
    %c0_38 = arith.constant 0 : index
    %120 = vector.load %arg6[%c0_37, %c0_38] : memref<16x32xf32, #tpu.memory_space<vmem>>, vector<16x32xf32>
    tpu.vector_store %arg6[%c0_37, %c0_38], %119 {strides = array<i32>} : memref<16x32xf32, #tpu.memory_space<vmem>>, vector<16x32xf32>,
    return
  }
}

</mosaic_0001>

<llo_original>
// kernel: tpu_custom_call.1
$region0: #{tpu_custom_call.1}
  #allocation0 [shape = 'u32[]', space=smem, size = 0x4, offset = 0x4, fixed_abs, tag = 'smem constant byte address 0x4 - core index']
  #allocation1 [shape = 'u32[72,128]{1,0:T(1,128)}', space=vmem, size = 0x9000, scoped, tag = 'internal scratch']
  %s0 = inlined_call_operand.hbm [shape: f32[4], index: 0, kind: input, shape index: {}]
  %s1 = inlined_call_operand.vmem [shape: f32[16,32], index: 1, kind: input, shape index: {}]
  %s2 = inlined_call_operand.vmem [shape: f32[16,16], index: 2, kind: input, shape index: {}]
  %s3 = inlined_call_operand.vmem [shape: f32[32,192], index: 3, kind: input, shape index: {}]
  %s4 = inlined_call_operand.vmem [shape: f32[1,224], index: 4, kind: input, shape index: {}]
  %s5 = inlined_call_operand.vmem [shape: f32[64,32], index: 5, kind: input, shape index: {}]
  %s6 = inlined_call_operand.hbm [shape: f32[16,32], index: 6, kind: output, shape index: {}]
  %s7 = sld [smem:[#allocation0]]
  $region38: #{tpu_custom_call.1} parent=0
    _
  %s9 = ssub.s32 1, %s7
  %s10 = scalar_select 0, %s9, %s7
  $region1: #{tpu_custom_call.1} parent=0
    #allocation2 [shape = 'u8[512]{0}', space=smem, size = 0x200, scoped, tag = 'input window, operand 0, single buffered']
    #allocation3 [shape = 's32[1]{0}', space=sflag, size = 0x4, scoped, tag = 'scoped memory for tpu_custom_call.1']
    #allocation4 [shape = 's32[1]{0}', space=sflag, size = 0x4, scoped, tag = 'scoped memory for tpu_custom_call.1']
    #allocation5 [shape = 'u8[8192]{0}', space=vmem, size = 0x2000, scoped, tag = 'output window, operand 0, single buffered']
    %11 = vsyncpa [#allocation4], 0
    %12 = vsyncpa [#allocation3], 0
    // Predicated region
    $region2: #{tpu_custom_call.1} parent=1 // pred_check
      _
    $region3: #{tpu_custom_call.1} parent=1 // pred_check_branch
      %14 = sbr.rel (0) target = $region5
    $region4: #{tpu_custom_call.1} parent=1 // pred_region
      %16 = vsyncadd [#allocation4], 0
      %s18 = sshll.u32 %s0, 4
      %s19 = int_to_ptr.hbm [resolvable:$true] %s18
      %21 = dma.hbm_to_smem %s19, 16, [#allocation2], [#allocation4]
    $region5: #{tpu_custom_call.1} parent=1 // pred_fallthru
      _
    // Predicated region
    $region6: #{tpu_custom_call.1} parent=1 // pred_check
      _
    $region7: #{tpu_custom_call.1} parent=1 // pred_check_branch
      %23 = sbr.rel (0) target = $region9
    $region8: #{tpu_custom_call.1} parent=1 // pred_region
      _
    $region9: #{tpu_custom_call.1} parent=1 // pred_fallthru
      _
    // Predicated region
    $region10: #{tpu_custom_call.1} parent=1 // pred_check
      _
    $region11: #{tpu_custom_call.1} parent=1 // pred_check_branch
      %25 = sbr.rel (0) target = $region13
    $region12: #{tpu_custom_call.1} parent=1 // pred_region
      _
    $region13: #{tpu_custom_call.1} parent=1 // pred_fallthru
      _
    // Predicated region
    $region14: #{tpu_custom_call.1} parent=1 // pred_check
      _
    $region15: #{tpu_custom_call.1} parent=1 // pred_check_branch
      %27 = sbr.rel (0) target = $region17
    $region16: #{tpu_custom_call.1} parent=1 // pred_region
      _
    $region17: #{tpu_custom_call.1} parent=1 // pred_fallthru
      _
    // Predicated region
    $region18: #{tpu_custom_call.1} parent=1 // pred_check
      _
    $region19: #{tpu_custom_call.1} parent=1 // pred_check_branch
      %29 = sbr.rel (0) target = $region21
    $region20: #{tpu_custom_call.1} parent=1 // pred_region
      _
    $region21: #{tpu_custom_call.1} parent=1 // pred_fallthru
      _
    // Predicated region
    $region22: #{tpu_custom_call.1} parent=1 // pred_check
      _
    $region23: #{tpu_custom_call.1} parent=1 // pred_check_branch
      %31 = sbr.rel (0) target = $region25
    $region24: #{tpu_custom_call.1} parent=1 // pred_region
      _
    $region25: #{tpu_custom_call.1} parent=1 // pred_fallthru
      _
    // Predicated region
    $region26: #{tpu_custom_call.1} parent=1 // pred_check
      _
    $region27: #{tpu_custom_call.1} parent=1 // pred_check_branch
      %33 = sbr.rel (0) target = $region29
    $region28: #{tpu_custom_call.1} parent=1 // pred_region
      %35 = dma.done [#allocation4], 16
    $region29: #{tpu_custom_call.1} parent=1 // pred_fallthru
      _
    %36 = sfence
    %v37 = vld [vmem:[%s1] sm:$0xff]
    %v38 = vld [vmem:[%s1 + $0x8] sm:$0xff]
    %s39 = sld [smem:[#allocation2]]
    %s40 = sld [smem:[#allocation2 + $0x1]]
    %s41 = sld [smem:[#allocation2 + $0x2]]
    %s42 = sld [smem:[#allocation2 + $0x3]]
    %vm43 = vcmask 261120
    %v44 = vsel %vm43, %v37, 0.0
    %45 = vadd.xlane.f32.xlu0 %v44
    %v46 = vpop.xlane.xlu0 %45
    %v47 = vsel %vm43, %v38, 0.0
    %48 = vadd.xlane.f32.xlu0 %v47
    %v49 = vpop.xlane.xlu0 %48
    %v50 = vrcp.pop 32.0
    %v51 = vmul.f32 32.0, %v50
    %v52 = vsub.f32 1.0, %v51
    %v53 = vmul.f32 %v50, %v52
    %v54 = vadd.f32 %v50, %v53
    %vm55 = vweird.f32 %v50
    %v56 = vsel %vm55, %v50, %v54
    %v57 = vmul.f32 %v46, %v56
    %v58 = vmul.f32 %v49, %v56
    %v59 = vsub.f32 %v37, %v57
    %v60 = vsub.f32 %v38, %v58
    %v61 = vmul.f32 %v59, %v59
    %v62 = vmul.f32 %v60, %v60
    %v63 = vsel %vm43, %v61, 0.0
    %64 = vadd.xlane.f32.xlu0 %v63
    %v65 = vpop.xlane.xlu0 %64
    %v66 = vsel %vm43, %v62, 0.0
    %67 = vadd.xlane.f32.xlu0 %v66
    %v68 = vpop.xlane.xlu0 %67
    %v69 = vrcp.pop 31.0
    %v70 = vmul.f32 31.0, %v69
    %v71 = vsub.f32 1.0, %v70
    %v72 = vmul.f32 %v69, %v71
    %v73 = vadd.f32 %v69, %v72
    %vm74 = vweird.f32 %v69
    %v75 = vsel %vm74, %v69, %v73
    %v76 = vmul.f32 %v65, %v75
    %v77 = vmul.f32 %v68, %v75
    %v78 = vrsqrt.pop %v76
    %v79 = vmul.f32 %v78, %v76
    %v80 = vmul.f32 %v79, %v78
    %v81 = vmul.f32 0.5, %v80
    %v82 = vsub.f32 1.5, %v81
    %v83 = vmul.f32 %v78, %v82
    %v84 = vmul.f32 %v76, %v83
    %vm85 = vcmp.eq.f32.partialorder %v76, inf
    %v86 = vsel %vm85, %v76, %v84
    %vm87 = vcmp.eq.f32.partialorder %v76, 0.0
    %v88 = vand.u32 %v76, 2147483648
    %v89 = vsel %vm87, %v88, %v86
    %v90 = vrsqrt.pop %v77
    %v91 = vmul.f32 %v90, %v77
    %v92 = vmul.f32 %v91, %v90
    %v93 = vmul.f32 0.5, %v92
    %v94 = vsub.f32 1.5, %v93
    %v95 = vmul.f32 %v90, %v94
    %v96 = vmul.f32 %v77, %v95
    %vm97 = vcmp.eq.f32.partialorder %v77, inf
    %v98 = vsel %vm97, %v77, %v96
    %vm99 = vcmp.eq.f32.partialorder %v77, 0.0
    %v100 = vand.u32 %v77, 2147483648
    %v101 = vsel %vm99, %v100, %v98
    %v102 = vstv %s39
    %v103 = vmul.f32 %v102, %v59
    %v104 = vmul.f32 %v102, %v60
    %v105 = vadd.f32 %v89, 1e-06
    %v106 = vadd.f32 %v101, 1e-06
    %v107 = vrcp.pop %v105
    %v108 = vmul.f32 %v105, %v107
    %v109 = vsub.f32 1.0, %v108
    %v110 = vmul.f32 %v107, %v109
    %v111 = vadd.f32 %v107, %v110
    %vm112 = vweird.f32 %v105
    %vm113 = vweird.f32 %v107
    %vm114 = vmor %vm112, %vm113
    %v115 = vsel %vm114, %v107, %v111
    %v116 = vand.u32 2147483647, %v105
    %vm117 = vcmp.eq.f32.partialorder %v116, 8.507059e+37
    %v118 = vand.u32 %v105, 2147483648
    %v119 = vor.u32 1.1754944e-38, %v118
    %v120 = vsel %vm117, %v119, %v115
    %v121 = vmul.f32 %v103, %v120
    %v122 = vrcp.pop %v106
    %v123 = vmul.f32 %v106, %v122
    %v124 = vsub.f32 1.0, %v123
    %v125 = vmul.f32 %v122, %v124
    %v126 = vadd.f32 %v122, %v125
    %vm127 = vweird.f32 %v106
    %vm128 = vweird.f32 %v122
    %vm129 = vmor %vm127, %vm128
    %v130 = vsel %vm129, %v122, %v126
    %v131 = vand.u32 2147483647, %v106
    %vm132 = vcmp.eq.f32.partialorder %v131, 8.507059e+37
    %v133 = vand.u32 %v106, 2147483648
    %v134 = vor.u32 1.1754944e-38, %v133
    %v135 = vsel %vm132, %v134, %v130
    %v136 = vmul.f32 %v104, %v135
    %v137 = vstv %s40
    %v138 = vadd.f32 %v121, %v137
    %v139 = vadd.f32 %v136, %v137
    %v140 = vld [vmem:[%s3] sm:$0xff]
    %v141 = vld [vmem:[%s3 + $0x10] sm:$0xff]
    %v142 = vld [vmem:[%s3 + $0x20] sm:$0xff]
    %v143 = vld [vmem:[%s3 + $0x30] sm:$0xff]
    %v144 = vld [vmem:[%s4] sm:$0x1]
    %v146 = vperm.slane %v144, 0
    %v149 = vsel %vm43, %v138, 0
    %v152 = vsel %vm43, %v139, 0
    %154 = vmatpush.msra.mxu0 0.0
    %155 = vmatpush.msra.mxu0 0.0
    %156 = vmatpush.msra.mxu0 0.0
    %157 = vmatpush.msra.mxu0 0.0
    %158 = vmatpush.msra.mxu0 0.0
    %159 = vmatpush.msra.mxu0 0.0
    %160 = vmatpush.msra.mxu0 0.0
    %161 = vmatpush.msra.mxu0 0.0
    %162 = vmatpush.msra.mxu0 0.0
    %163 = vmatpush.msra.mxu0 0.0
    %164 = vmatpush.msra.mxu0 0.0
    %165 = vmatpush.msra.mxu0 0.0
    %166 = vmatpush.msra.mxu0 %v143
    %167 = vmatpush.msra.mxu0 %v142
    %168 = vmatpush.msra.mxu0 %v141
    %169 = vmatpush.msra.mxu0 %v140
    %170 = vmatmul.f32.gmra.mxu0 %v149
    %v171 = vpop.f32.mrf.mxu0
    %v172 = vadd.f32 %v146, %v171
    %173 = vmatmul.f32.gmra.mxu0 %v152
    %v174 = vpop.f32.mrf.mxu0
    %v175 = vadd.f32 %v146, %v174
    %176 = vdwg.mxu0
    %179 = vrot.lane.b32.xlu0 %v172, 120
    %v180 = vpop.permute.xlu0 %179
    %181 = vrot.lane.b32.xlu0 %v175, 120
    %v182 = vpop.permute.xlu0 %181
    %183 = vrot.lane.b32.xlu0 %v172, 112
    %v184 = vpop.permute.xlu0 %183
    %185 = vrot.lane.b32.xlu0 %v175, 112
    %v186 = vpop.permute.xlu0 %185
    %187 = vrot.lane.b32.xlu0 %v172, 104
    %v188 = vpop.permute.xlu0 %187
    %189 = vrot.lane.b32.xlu0 %v175, 104
    %v190 = vpop.permute.xlu0 %189
    %191 = vrot.lane.b32.xlu0 %v172, 96
    %v192 = vpop.permute.xlu0 %191
    %193 = vrot.lane.b32.xlu0 %v175, 96
    %v194 = vpop.permute.xlu0 %193
    %195 = vrot.lane.b32.xlu0 %v172, 88
    %v196 = vpop.permute.xlu0 %195
    %197 = vrot.lane.b32.xlu0 %v175, 88
    %v198 = vpop.permute.xlu0 %197
    %199 = vrot.lane.b32.xlu0 %v172, 80
    %v200 = vpop.permute.xlu0 %199
    %201 = vrot.lane.b32.xlu0 %v175, 80
    %v202 = vpop.permute.xlu0 %201
    %203 = vrot.lane.b32.xlu0 %v172, 72
    %v204 = vpop.permute.xlu0 %203
    %205 = vrot.lane.b32.xlu0 %v175, 72
    %v206 = vpop.permute.xlu0 %205
    %207 = vrot.lane.b32.xlu0 %v172, 64
    %v208 = vpop.permute.xlu0 %207
    %209 = vrot.lane.b32.xlu0 %v175, 64
    %v210 = vpop.permute.xlu0 %209
    %213 = vrot.lane.b32.xlu0 %v172, 56
    %v214 = vpop.permute.xlu0 %213
    %215 = vrot.lane.b32.xlu0 %v175, 56
    %v216 = vpop.permute.xlu0 %215
    %219 = vrot.lane.b32.xlu0 %v172, 48
    %v220 = vpop.permute.xlu0 %219
    %221 = vrot.lane.b32.xlu0 %v175, 48
    %v222 = vpop.permute.xlu0 %221
    %225 = vrot.lane.b32.xlu0 %v172, 40
    %v226 = vpop.permute.xlu0 %225
    %227 = vrot.lane.b32.xlu0 %v175, 40
    %v228 = vpop.permute.xlu0 %227
    %v231 = vld [vmem:[%s2] sm:$0xff]
    %v232 = vld [vmem:[%s2 + $0x8] sm:$0xff]
    %vm233 = vcmask 64512
    %v234 = vsel %vm233, %v172, 0
    %v236 = vsel %vm233, %v175, 0
    %v238 = vsel %vm233, %v192, 0
    %v240 = vsel %vm233, %v194, 0
    %242 = vmatpush.xpose.msra.mxu0 0.0
    %243 = vmatpush.xpose.msra.mxu0 0.0
    %244 = vmatpush.xpose.msra.mxu0 0.0
    %245 = vmatpush.xpose.msra.mxu0 0.0
    %246 = vmatpush.xpose.msra.mxu0 0.0
    %247 = vmatpush.xpose.msra.mxu0 0.0
    %248 = vmatpush.xpose.msra.mxu0 0.0
    %249 = vmatpush.xpose.msra.mxu0 0.0
    %250 = vmatpush.xpose.msra.mxu0 0.0
    %251 = vmatpush.xpose.msra.mxu0 0.0
    %252 = vmatpush.xpose.msra.mxu0 0.0
    %253 = vmatpush.xpose.msra.mxu0 0.0
    %254 = vmatpush.xpose.msra.mxu0 0.0
    %255 = vmatpush.xpose.msra.mxu0 0.0
    %256 = vmatpush.xpose.msra.mxu0 %v240
    %257 = vmatpush.xpose.msra.mxu0 %v238
    %258 = vmatmul.f32.gmra.mxu0 %v234
    %v259 = vpop.f32.mrf.mxu0
    %v260 = vadd.f32 %v231, %v259
    %261 = vmatmul.f32.gmra.mxu0 %v236
    %v262 = vpop.f32.mrf.mxu0
    %v263 = vadd.f32 %v232, %v262
    %264 = vdwg.mxu0
    %v265 = vsel %vm233, %v180, 0
    %v267 = vsel %vm233, %v182, 0
    %v269 = vsel %vm233, %v196, 0
    %v271 = vsel %vm233, %v198, 0
    %273 = vmatpush.xpose.msra.mxu0 0.0
    %274 = vmatpush.xpose.msra.mxu0 0.0
    %275 = vmatpush.xpose.msra.mxu0 0.0
    %276 = vmatpush.xpose.msra.mxu0 0.0
    %277 = vmatpush.xpose.msra.mxu0 0.0
    %278 = vmatpush.xpose.msra.mxu0 0.0
    %279 = vmatpush.xpose.msra.mxu0 0.0
    %280 = vmatpush.xpose.msra.mxu0 0.0
    %281 = vmatpush.xpose.msra.mxu0 0.0
    %282 = vmatpush.xpose.msra.mxu0 0.0
    %283 = vmatpush.xpose.msra.mxu0 0.0
    %284 = vmatpush.xpose.msra.mxu0 0.0
    %285 = vmatpush.xpose.msra.mxu0 0.0
    %286 = vmatpush.xpose.msra.mxu0 0.0
    %287 = vmatpush.xpose.msra.mxu0 %v271
    %288 = vmatpush.xpose.msra.mxu0 %v269
    %289 = vmatmul.f32.gmra.mxu0 %v265
    %v290 = vpop.f32.mrf.mxu0
    %v291 = vadd.f32 %v231, %v290
    %292 = vmatmul.f32.gmra.mxu0 %v267
    %v293 = vpop.f32.mrf.mxu0
    %v294 = vadd.f32 %v232, %v293
    %295 = vdwg.mxu0
    %v296 = vsel %vm233, %v184, 0
    %v298 = vsel %vm233, %v186, 0
    %v300 = vsel %vm233, %v200, 0
    %v302 = vsel %vm233, %v202, 0
    %304 = vmatpush.xpose.msra.mxu0 0.0
    %305 = vmatpush.xpose.msra.mxu0 0.0
    %306 = vmatpush.xpose.msra.mxu0 0.0
    %307 = vmatpush.xpose.msra.mxu0 0.0
    %308 = vmatpush.xpose.msra.mxu0 0.0
    %309 = vmatpush.xpose.msra.mxu0 0.0
    %310 = vmatpush.xpose.msra.mxu0 0.0
    %311 = vmatpush.xpose.msra.mxu0 0.0
    %312 = vmatpush.xpose.msra.mxu0 0.0
    %313 = vmatpush.xpose.msra.mxu0 0.0
    %314 = vmatpush.xpose.msra.mxu0 0.0
    %315 = vmatpush.xpose.msra.mxu0 0.0
    %316 = vmatpush.xpose.msra.mxu0 0.0
    %317 = vmatpush.xpose.msra.mxu0 0.0
    %318 = vmatpush.xpose.msra.mxu0 %v302
    %319 = vmatpush.xpose.msra.mxu0 %v300
    %320 = vmatmul.f32.gmra.mxu0 %v296
    %v321 = vpop.f32.mrf.mxu0
    %v322 = vadd.f32 %v231, %v321
    %323 = vmatmul.f32.gmra.mxu0 %v298
    %v324 = vpop.f32.mrf.mxu0
    %v325 = vadd.f32 %v232, %v324
    %326 = vdwg.mxu0
    %v327 = vsel %vm233, %v188, 0
    %v329 = vsel %vm233, %v190, 0
    %v331 = vsel %vm233, %v204, 0
    %v333 = vsel %vm233, %v206, 0
    %335 = vmatpush.xpose.msra.mxu0 0.0
    %336 = vmatpush.xpose.msra.mxu0 0.0
    %337 = vmatpush.xpose.msra.mxu0 0.0
    %338 = vmatpush.xpose.msra.mxu0 0.0
    %339 = vmatpush.xpose.msra.mxu0 0.0
    %340 = vmatpush.xpose.msra.mxu0 0.0
    %341 = vmatpush.xpose.msra.mxu0 0.0
    %342 = vmatpush.xpose.msra.mxu0 0.0
    %343 = vmatpush.xpose.msra.mxu0 0.0
    %344 = vmatpush.xpose.msra.mxu0 0.0
    %345 = vmatpush.xpose.msra.mxu0 0.0
    %346 = vmatpush.xpose.msra.mxu0 0.0
    %347 = vmatpush.xpose.msra.mxu0 0.0
    %348 = vmatpush.xpose.msra.mxu0 0.0
    %349 = vmatpush.xpose.msra.mxu0 %v333
    %350 = vmatpush.xpose.msra.mxu0 %v331
    %351 = vmatmul.f32.gmra.mxu0 %v327
    %v352 = vpop.f32.mrf.mxu0
    %v353 = vadd.f32 %v231, %v352
    %354 = vmatmul.f32.gmra.mxu0 %v329
    %v355 = vpop.f32.mrf.mxu0
    %v356 = vadd.f32 %v232, %v355
    %357 = vdwg.mxu0
    %vm358 = vcmask 130048
    %v359 = vsel %vm358, %v260, -inf
    %360 = vmax.xlane.f32.xlu0 %v359
    %v361 = vpop.xlane.xlu0 %360
    %v362 = vsel %vm358, %v263, -inf
    %363 = vmax.xlane.f32.xlu0 %v362
    %v364 = vpop.xlane.xlu0 %363
    %v365 = vsel %vm358, %v291, -inf
    %366 = vmax.xlane.f32.xlu0 %v365
    %v367 = vpop.xlane.xlu0 %366
    %v368 = vsel %vm358, %v294, -inf
    %369 = vmax.xlane.f32.xlu0 %v368
    %v370 = vpop.xlane.xlu0 %369
    %v371 = vsel %vm358, %v322, -inf
    %372 = vmax.xlane.f32.xlu0 %v371
    %v373 = vpop.xlane.xlu0 %372
    %v374 = vsel %vm358, %v325, -inf
    %375 = vmax.xlane.f32.xlu0 %v374
    %v376 = vpop.xlane.xlu0 %375
    %v377 = vsel %vm358, %v353, -inf
    %378 = vmax.xlane.f32.xlu0 %v377
    %v379 = vpop.xlane.xlu0 %378
    %v380 = vsel %vm358, %v356, -inf
    %381 = vmax.xlane.f32.xlu0 %v380
    %v382 = vpop.xlane.xlu0 %381
    %v383 = vsub.f32 %v260, %v361
    %v384 = vsub.f32 %v263, %v364
    %v385 = vsub.f32 %v291, %v367
    %v386 = vsub.f32 %v294, %v370
    %v387 = vsub.f32 %v322, %v373
    %v388 = vsub.f32 %v325, %v376
    %v389 = vsub.f32 %v353, %v379
    %v390 = vsub.f32 %v356, %v382
    %v391 = vmul.f32 %v383, 1.442695
    %v392 = vpow.pop %v391
    %v393 = vmul.f32 %v384, 1.442695
    %v394 = vpow.pop %v393
    %v395 = vmul.f32 %v385, 1.442695
    %v396 = vpow.pop %v395
    %v397 = vmul.f32 %v386, 1.442695
    %v398 = vpow.pop %v397
    %v399 = vmul.f32 %v387, 1.442695
    %v400 = vpow.pop %v399
    %v401 = vmul.f32 %v388, 1.442695
    %v402 = vpow.pop %v401
    %v403 = vmul.f32 %v389, 1.442695
    %v404 = vpow.pop %v403
    %v405 = vmul.f32 %v390, 1.442695
    %v406 = vpow.pop %v405
    %v407 = vsel %vm358, %v392, 0.0
    %408 = vadd.xlane.f32.xlu0 %v407
    %v409 = vpop.xlane.xlu0 %408
    %v410 = vsel %vm358, %v394, 0.0
    %411 = vadd.xlane.f32.xlu0 %v410
    %v412 = vpop.xlane.xlu0 %411
    %v413 = vsel %vm358, %v396, 0.0
    %414 = vadd.xlane.f32.xlu0 %v413
    %v415 = vpop.xlane.xlu0 %414
    %v416 = vsel %vm358, %v398, 0.0
    %417 = vadd.xlane.f32.xlu0 %v416
    %v418 = vpop.xlane.xlu0 %417
    %v419 = vsel %vm358, %v400, 0.0
    %420 = vadd.xlane.f32.xlu0 %v419
    %v421 = vpop.xlane.xlu0 %420
    %v422 = vsel %vm358, %v402, 0.0
    %423 = vadd.xlane.f32.xlu0 %v422
    %v424 = vpop.xlane.xlu0 %423
    %v425 = vsel %vm358, %v404, 0.0
    %426 = vadd.xlane.f32.xlu0 %v425
    %v427 = vpop.xlane.xlu0 %426
    %v428 = vsel %vm358, %v406, 0.0
    %429 = vadd.xlane.f32.xlu0 %v428
    %v430 = vpop.xlane.xlu0 %429
    %v431 = vrcp.pop %v409
    %v432 = vmul.f32 %v409, %v431
    %v433 = vsub.f32 1.0, %v432
    %v434 = vmul.f32 %v431, %v433
    %v435 = vadd.f32 %v431, %v434
    %vm436 = vweird.f32 %v409
    %vm437 = vweird.f32 %v431
    %vm438 = vmor %vm436, %vm437
    %v439 = vsel %vm438, %v431, %v435
    %v440 = vand.u32 2147483647, %v409
    %vm441 = vcmp.eq.f32.partialorder %v440, 8.507059e+37
    %v442 = vand.u32 %v409, 2147483648
    %v443 = vor.u32 1.1754944e-38, %v442
    %v444 = vsel %vm441, %v443, %v439
    %v445 = vmul.f32 1.0, %v444
    %v446 = vrcp.pop %v412
    %v447 = vmul.f32 %v412, %v446
    %v448 = vsub.f32 1.0, %v447
    %v449 = vmul.f32 %v446, %v448
    %v450 = vadd.f32 %v446, %v449
    %vm451 = vweird.f32 %v412
    %vm452 = vweird.f32 %v446
    %vm453 = vmor %vm451, %vm452
    %v454 = vsel %vm453, %v446, %v450
    %v455 = vand.u32 2147483647, %v412
    %vm456 = vcmp.eq.f32.partialorder %v455, 8.507059e+37
    %v457 = vand.u32 %v412, 2147483648
    %v458 = vor.u32 1.1754944e-38, %v457
    %v459 = vsel %vm456, %v458, %v454
    %v460 = vmul.f32 1.0, %v459
    %v461 = vrcp.pop %v415
    %v462 = vmul.f32 %v415, %v461
    %v463 = vsub.f32 1.0, %v462
    %v464 = vmul.f32 %v461, %v463
    %v465 = vadd.f32 %v461, %v464
    %vm466 = vweird.f32 %v415
    %vm467 = vweird.f32 %v461
    %vm468 = vmor %vm466, %vm467
    %v469 = vsel %vm468, %v461, %v465
    %v470 = vand.u32 2147483647, %v415
    %vm471 = vcmp.eq.f32.partialorder %v470, 8.507059e+37
    %v472 = vand.u32 %v415, 2147483648
    %v473 = vor.u32 1.1754944e-38, %v472
    %v474 = vsel %vm471, %v473, %v469
    %v475 = vmul.f32 1.0, %v474
    %v476 = vrcp.pop %v418
    %v477 = vmul.f32 %v418, %v476
    %v478 = vsub.f32 1.0, %v477
    %v479 = vmul.f32 %v476, %v478
    %v480 = vadd.f32 %v476, %v479
    %vm481 = vweird.f32 %v418
    %vm482 = vweird.f32 %v476
    %vm483 = vmor %vm481, %vm482
    %v484 = vsel %vm483, %v476, %v480
    %v485 = vand.u32 2147483647, %v418
    %vm486 = vcmp.eq.f32.partialorder %v485, 8.507059e+37
    %v487 = vand.u32 %v418, 2147483648
    %v488 = vor.u32 1.1754944e-38, %v487
    %v489 = vsel %vm486, %v488, %v484
    %v490 = vmul.f32 1.0, %v489
    %v491 = vrcp.pop %v421
    %v492 = vmul.f32 %v421, %v491
    %v493 = vsub.f32 1.0, %v492
    %v494 = vmul.f32 %v491, %v493
    %v495 = vadd.f32 %v491, %v494
    %vm496 = vweird.f32 %v421
    %vm497 = vweird.f32 %v491
    %vm498 = vmor %vm496, %vm497
    %v499 = vsel %vm498, %v491, %v495
    %v500 = vand.u32 2147483647, %v421
    %vm501 = vcmp.eq.f32.partialorder %v500, 8.507059e+37
    %v502 = vand.u32 %v421, 2147483648
    %v503 = vor.u32 1.1754944e-38, %v502
    %v504 = vsel %vm501, %v503, %v499
    %v505 = vmul.f32 1.0, %v504
    %v506 = vrcp.pop %v424
    %v507 = vmul.f32 %v424, %v506
    %v508 = vsub.f32 1.0, %v507
    %v509 = vmul.f32 %v506, %v508
    %v510 = vadd.f32 %v506, %v509
    %vm511 = vweird.f32 %v424
    %vm512 = vweird.f32 %v506
    %vm513 = vmor %vm511, %vm512
    %v514 = vsel %vm513, %v506, %v510
    %v515 = vand.u32 2147483647, %v424
    %vm516 = vcmp.eq.f32.partialorder %v515, 8.507059e+37
    %v517 = vand.u32 %v424, 2147483648
    %v518 = vor.u32 1.1754944e-38, %v517
    %v519 = vsel %vm516, %v518, %v514
    %v520 = vmul.f32 1.0, %v519
    %v521 = vrcp.pop %v427
    %v522 = vmul.f32 %v427, %v521
    %v523 = vsub.f32 1.0, %v522
    %v524 = vmul.f32 %v521, %v523
    %v525 = vadd.f32 %v521, %v524
    %vm526 = vweird.f32 %v427
    %vm527 = vweird.f32 %v521
    %vm528 = vmor %vm526, %vm527
    %v529 = vsel %vm528, %v521, %v525
    %v530 = vand.u32 2147483647, %v427
    %vm531 = vcmp.eq.f32.partialorder %v530, 8.507059e+37
    %v532 = vand.u32 %v427, 2147483648
    %v533 = vor.u32 1.1754944e-38, %v532
    %v534 = vsel %vm531, %v533, %v529
    %v535 = vmul.f32 1.0, %v534
    %v536 = vrcp.pop %v430
    %v537 = vmul.f32 %v430, %v536
    %v538 = vsub.f32 1.0, %v537
    %v539 = vmul.f32 %v536, %v538
    %v540 = vadd.f32 %v536, %v539
    %vm541 = vweird.f32 %v430
    %vm542 = vweird.f32 %v536
    %vm543 = vmor %vm541, %vm542
    %v544 = vsel %vm543, %v536, %v540
    %v545 = vand.u32 2147483647, %v430
    %vm546 = vcmp.eq.f32.partialorder %v545, 8.507059e+37
    %v547 = vand.u32 %v430, 2147483648
    %v548 = vor.u32 1.1754944e-38, %v547
    %v549 = vsel %vm546, %v548, %v544
    %v550 = vmul.f32 1.0, %v549
    %v551 = vmul.f32 %v392, %v445
    %v552 = vmul.f32 %v394, %v460
    %v553 = vmul.f32 %v396, %v475
    %v554 = vmul.f32 %v398, %v490
    %v555 = vmul.f32 %v400, %v505
    %v556 = vmul.f32 %v402, %v520
    %v557 = vmul.f32 %v404, %v535
    %v558 = vmul.f32 %v406, %v550
    %v560 = vsel %vm358, %v551, 0
    %v563 = vsel %vm358, %v552, 0
    %565 = vmatpush.msra.mxu0 0.0
    %566 = vmatpush.msra.mxu0 0.0
    %567 = vmatpush.msra.mxu0 0.0
    %568 = vmatpush.msra.mxu0 0.0
    %569 = vmatpush.msra.mxu0 0.0
    %570 = vmatpush.msra.mxu0 0.0
    %571 = vmatpush.msra.mxu0 0.0
    %572 = vmatpush.msra.mxu0 0.0
    %573 = vmatpush.msra.mxu0 0.0
    %574 = vmatpush.msra.mxu0 0.0
    %575 = vmatpush.msra.mxu0 0.0
    %576 = vmatpush.msra.mxu0 0.0
    %577 = vmatpush.msra.mxu0 0.0
    %578 = vmatpush.msra.mxu0 0.0
    %579 = vmatpush.msra.mxu0 %v210
    %580 = vmatpush.msra.mxu0 %v208
    %581 = vmatmul.f32.gmra.mxu0 %v560
    %v582 = vpop.f32.mrf.mxu0
    %v583 = vadd.f32 0.0, %v582
    %584 = vmatmul.f32.gmra.mxu0 %v563
    %v585 = vpop.f32.mrf.mxu0
    %v586 = vadd.f32 0.0, %v585
    %587 = vdwg.mxu0
    %v589 = vsel %vm358, %v553, 0
    %v592 = vsel %vm358, %v554, 0
    %594 = vmatpush.msra.mxu0 0.0
    %595 = vmatpush.msra.mxu0 0.0
    %596 = vmatpush.msra.mxu0 0.0
    %597 = vmatpush.msra.mxu0 0.0
    %598 = vmatpush.msra.mxu0 0.0
    %599 = vmatpush.msra.mxu0 0.0
    %600 = vmatpush.msra.mxu0 0.0
    %601 = vmatpush.msra.mxu0 0.0
    %602 = vmatpush.msra.mxu0 0.0
    %603 = vmatpush.msra.mxu0 0.0
    %604 = vmatpush.msra.mxu0 0.0
    %605 = vmatpush.msra.mxu0 0.0
    %606 = vmatpush.msra.mxu0 0.0
    %607 = vmatpush.msra.mxu0 0.0
    %608 = vmatpush.msra.mxu0 %v216
    %609 = vmatpush.msra.mxu0 %v214
    %610 = vmatmul.f32.gmra.mxu0 %v589
    %v611 = vpop.f32.mrf.mxu0
    %v612 = vadd.f32 0.0, %v611
    %613 = vmatmul.f32.gmra.mxu0 %v592
    %v614 = vpop.f32.mrf.mxu0
    %v615 = vadd.f32 0.0, %v614
    %616 = vdwg.mxu0
    %v618 = vsel %vm358, %v555, 0
    %v621 = vsel %vm358, %v556, 0
    %623 = vmatpush.msra.mxu0 0.0
    %624 = vmatpush.msra.mxu0 0.0
    %625 = vmatpush.msra.mxu0 0.0
    %626 = vmatpush.msra.mxu0 0.0
    %627 = vmatpush.msra.mxu0 0.0
    %628 = vmatpush.msra.mxu0 0.0
    %629 = vmatpush.msra.mxu0 0.0
    %630 = vmatpush.msra.mxu0 0.0
    %631 = vmatpush.msra.mxu0 0.0
    %632 = vmatpush.msra.mxu0 0.0
    %633 = vmatpush.msra.mxu0 0.0
    %634 = vmatpush.msra.mxu0 0.0
    %635 = vmatpush.msra.mxu0 0.0
    %636 = vmatpush.msra.mxu0 0.0
    %637 = vmatpush.msra.mxu0 %v222
    %638 = vmatpush.msra.mxu0 %v220
    %639 = vmatmul.f32.gmra.mxu0 %v618
    %v640 = vpop.f32.mrf.mxu0
    %v641 = vadd.f32 0.0, %v640
    %642 = vmatmul.f32.gmra.mxu0 %v621
    %v643 = vpop.f32.mrf.mxu0
    %v644 = vadd.f32 0.0, %v643
    %645 = vdwg.mxu0
    %v647 = vsel %vm358, %v557, 0
    %v650 = vsel %vm358, %v558, 0
    %652 = vmatpush.msra.mxu0 0.0
    %653 = vmatpush.msra.mxu0 0.0
    %654 = vmatpush.msra.mxu0 0.0
    %655 = vmatpush.msra.mxu0 0.0
    %656 = vmatpush.msra.mxu0 0.0
    %657 = vmatpush.msra.mxu0 0.0
    %658 = vmatpush.msra.mxu0 0.0
    %659 = vmatpush.msra.mxu0 0.0
    %660 = vmatpush.msra.mxu0 0.0
    %661 = vmatpush.msra.mxu0 0.0
    %662 = vmatpush.msra.mxu0 0.0
    %663 = vmatpush.msra.mxu0 0.0
    %664 = vmatpush.msra.mxu0 0.0
    %665 = vmatpush.msra.mxu0 0.0
    %666 = vmatpush.msra.mxu0 %v228
    %667 = vmatpush.msra.mxu0 %v226
    %668 = vmatmul.f32.gmra.mxu0 %v647
    %v669 = vpop.f32.mrf.mxu0
    %v670 = vadd.f32 0.0, %v669
    %671 = vmatmul.f32.gmra.mxu0 %v650
    %v672 = vpop.f32.mrf.mxu0
    %v673 = vadd.f32 0.0, %v672
    %674 = vdwg.mxu0
    %v675 = vld [vmem:[%s3] sm:$0xff]
    %v676 = vld [vmem:[%s3 + $0x10] sm:$0xff]
    %v677 = vld [vmem:[%s3 + $0x20] sm:$0xff]
    %v678 = vld [vmem:[%s3 + $0x30] sm:$0xff]
    %680 = vrot.lane.b32.xlu0 %v675, 32
    %v681 = vpop.permute.xlu0 %680
    %v684 = vsel %vm233, %v583, 0
    %v687 = vsel %vm233, %v586, 0
    %689 = vmatpush.msra.mxu0 0.0
    %690 = vmatpush.msra.mxu0 0.0
    %691 = vmatpush.msra.mxu0 0.0
    %692 = vmatpush.msra.mxu0 0.0
    %693 = vmatpush.msra.mxu0 0.0
    %694 = vmatpush.msra.mxu0 0.0
    %695 = vmatpush.msra.mxu0 0.0
    %696 = vmatpush.msra.mxu0 0.0
    %697 = vmatpush.msra.mxu0 0.0
    %698 = vmatpush.msra.mxu0 0.0
    %699 = vmatpush.msra.mxu0 0.0
    %700 = vmatpush.msra.mxu0 0.0
    %701 = vmatpush.msra.mxu0 0.0
    %702 = vmatpush.msra.mxu0 0.0
    %703 = vmatpush.msra.mxu0 0.0
    %704 = vmatpush.msra.mxu0 %v681
    %705 = vmatmul.f32.gmra.mxu0 %v684
    %v706 = vpop.f32.mrf.mxu0
    %v707 = vadd.f32 0.0, %v706
    %708 = vmatmul.f32.gmra.mxu0 %v687
    %v709 = vpop.f32.mrf.mxu0
    %v710 = vadd.f32 0.0, %v709
    %711 = vdwg.mxu0
    %713 = vrot.lane.b32.xlu0 %v676, 32
    %v714 = vpop.permute.xlu0 %713
    %v717 = vsel %vm233, %v612, 0
    %v720 = vsel %vm233, %v615, 0
    %722 = vmatpush.msra.mxu0 0.0
    %723 = vmatpush.msra.mxu0 0.0
    %724 = vmatpush.msra.mxu0 0.0
    %725 = vmatpush.msra.mxu0 0.0
    %726 = vmatpush.msra.mxu0 0.0
    %727 = vmatpush.msra.mxu0 0.0
    %728 = vmatpush.msra.mxu0 0.0
    %729 = vmatpush.msra.mxu0 0.0
    %730 = vmatpush.msra.mxu0 0.0
    %731 = vmatpush.msra.mxu0 0.0
    %732 = vmatpush.msra.mxu0 0.0
    %733 = vmatpush.msra.mxu0 0.0
    %734 = vmatpush.msra.mxu0 0.0
    %735 = vmatpush.msra.mxu0 0.0
    %736 = vmatpush.msra.mxu0 0.0
    %737 = vmatpush.msra.mxu0 %v714
    %738 = vmatmul.f32.gmra.mxu0 %v717
    %v739 = vpop.f32.mrf.mxu0
    %v740 = vadd.f32 0.0, %v739
    %741 = vmatmul.f32.gmra.mxu0 %v720
    %v742 = vpop.f32.mrf.mxu0
    %v743 = vadd.f32 0.0, %v742
    %744 = vdwg.mxu0
    %746 = vrot.lane.b32.xlu0 %v677, 32
    %v747 = vpop.permute.xlu0 %746
    %v750 = vsel %vm233, %v641, 0
    %v753 = vsel %vm233, %v644, 0
    %755 = vmatpush.msra.mxu0 0.0
    %756 = vmatpush.msra.mxu0 0.0
    %757 = vmatpush.msra.mxu0 0.0
    %758 = vmatpush.msra.mxu0 0.0
    %759 = vmatpush.msra.mxu0 0.0
    %760 = vmatpush.msra.mxu0 0.0
    %761 = vmatpush.msra.mxu0 0.0
    %762 = vmatpush.msra.mxu0 0.0
    %763 = vmatpush.msra.mxu0 0.0
    %764 = vmatpush.msra.mxu0 0.0
    %765 = vmatpush.msra.mxu0 0.0
    %766 = vmatpush.msra.mxu0 0.0
    %767 = vmatpush.msra.mxu0 0.0
    %768 = vmatpush.msra.mxu0 0.0
    %769 = vmatpush.msra.mxu0 0.0
    %770 = vmatpush.msra.mxu0 %v747
    %771 = vmatmul.f32.gmra.mxu0 %v750
    %v772 = vpop.f32.mrf.mxu0
    %v773 = vadd.f32 0.0, %v772
    %774 = vmatmul.f32.gmra.mxu0 %v753
    %v775 = vpop.f32.mrf.mxu0
    %v776 = vadd.f32 0.0, %v775
    %777 = vdwg.mxu0
    %779 = vrot.lane.b32.xlu0 %v678, 32
    %v780 = vpop.permute.xlu0 %779
    %v783 = vsel %vm233, %v670, 0
    %v786 = vsel %vm233, %v673, 0
    %788 = vmatpush.msra.mxu0 0.0
    %789 = vmatpush.msra.mxu0 0.0
    %790 = vmatpush.msra.mxu0 0.0
    %791 = vmatpush.msra.mxu0 0.0
    %792 = vmatpush.msra.mxu0 0.0
    %793 = vmatpush.msra.mxu0 0.0
    %794 = vmatpush.msra.mxu0 0.0
    %795 = vmatpush.msra.mxu0 0.0
    %796 = vmatpush.msra.mxu0 0.0
    %797 = vmatpush.msra.mxu0 0.0
    %798 = vmatpush.msra.mxu0 0.0
    %799 = vmatpush.msra.mxu0 0.0
    %800 = vmatpush.msra.mxu0 0.0
    %801 = vmatpush.msra.mxu0 0.0
    %802 = vmatpush.msra.mxu0 0.0
    %803 = vmatpush.msra.mxu0 %v780
    %804 = vmatmul.f32.gmra.mxu0 %v783
    %v805 = vpop.f32.mrf.mxu0
    %v806 = vadd.f32 0.0, %v805
    %807 = vmatmul.f32.gmra.mxu0 %v786
    %v808 = vpop.f32.mrf.mxu0
    %v809 = vadd.f32 0.0, %v808
    %810 = vdwg.mxu0
    %v811 = vsel %vm43, %v707, 0.0
    %v812 = vsel %vm43, %v740, 0.0
    %v813 = vadd.f32 %v811, %v812
    %v814 = vsel %vm43, %v773, 0.0
    %v815 = vadd.f32 %v813, %v814
    %v816 = vsel %vm43, %v806, 0.0
    %v817 = vadd.f32 %v815, %v816
    %v818 = vsel %vm43, %v710, 0.0
    %v819 = vsel %vm43, %v743, 0.0
    %v820 = vadd.f32 %v818, %v819
    %v821 = vsel %vm43, %v776, 0.0
    %v822 = vadd.f32 %v820, %v821
    %v823 = vsel %vm43, %v809, 0.0
    %v824 = vadd.f32 %v822, %v823
    %v825 = vld [vmem:[%s4] sm:$0x1]
    %v827 = vperm.slane %v825, 0
    %828 = vrot.lane.b32.xlu0 %v827, 32
    %v829 = vpop.permute.xlu0 %828
    %v831 = vadd.f32 %v817, %v829
    %v832 = vadd.f32 %v824, %v829
    %v833 = vadd.f32 %v37, %v831
    %v834 = vadd.f32 %v38, %v832
    %v835 = vsel %vm43, %v833, 0.0
    %836 = vadd.xlane.f32.xlu0 %v835
    %v837 = vpop.xlane.xlu0 %836
    %v838 = vsel %vm43, %v834, 0.0
    %839 = vadd.xlane.f32.xlu0 %v838
    %v840 = vpop.xlane.xlu0 %839
    %v841 = vmul.f32 %v837, %v56
    %v842 = vmul.f32 %v840, %v56
    %v843 = vsub.f32 %v833, %v841
    %v844 = vsub.f32 %v834, %v842
    %v845 = vmul.f32 %v843, %v843
    %v846 = vmul.f32 %v844, %v844
    %v847 = vsel %vm43, %v845, 0.0
    %848 = vadd.xlane.f32.xlu0 %v847
    %v849 = vpop.xlane.xlu0 %848
    %v850 = vsel %vm43, %v846, 0.0
    %851 = vadd.xlane.f32.xlu0 %v850
    %v852 = vpop.xlane.xlu0 %851
    %v853 = vmul.f32 %v849, %v75
    %v854 = vmul.f32 %v852, %v75
    %v855 = vrsqrt.pop %v853
    %v856 = vmul.f32 %v855, %v853
    %v857 = vmul.f32 %v856, %v855
    %v858 = vmul.f32 0.5, %v857
    %v859 = vsub.f32 1.5, %v858
    %v860 = vmul.f32 %v855, %v859
    %v861 = vmul.f32 %v853, %v860
    %vm862 = vcmp.eq.f32.partialorder %v853, inf
    %v863 = vsel %vm862, %v853, %v861
    %vm864 = vcmp.eq.f32.partialorder %v853, 0.0
    %v865 = vand.u32 %v853, 2147483648
    %v866 = vsel %vm864, %v865, %v863
    %v867 = vrsqrt.pop %v854
    %v868 = vmul.f32 %v867, %v854
    %v869 = vmul.f32 %v868, %v867
    %v870 = vmul.f32 0.5, %v869
    %v871 = vsub.f32 1.5, %v870
    %v872 = vmul.f32 %v867, %v871
    %v873 = vmul.f32 %v854, %v872
    %vm874 = vcmp.eq.f32.partialorder %v854, inf
    %v875 = vsel %vm874, %v854, %v873
    %vm876 = vcmp.eq.f32.partialorder %v854, 0.0
    %v877 = vand.u32 %v854, 2147483648
    %v878 = vsel %vm876, %v877, %v875
    %v879 = vstv %s41
    %v880 = vmul.f32 %v879, %v843
    %v881 = vmul.f32 %v879, %v844
    %v882 = vadd.f32 %v866, 1e-06
    %v883 = vadd.f32 %v878, 1e-06
    %v884 = vrcp.pop %v882
    %v885 = vmul.f32 %v882, %v884
    %v886 = vsub.f32 1.0, %v885
    %v887 = vmul.f32 %v884, %v886
    %v888 = vadd.f32 %v884, %v887
    %vm889 = vweird.f32 %v882
    %vm890 = vweird.f32 %v884
    %vm891 = vmor %vm889, %vm890
    %v892 = vsel %vm891, %v884, %v888
    %v893 = vand.u32 2147483647, %v882
    %vm894 = vcmp.eq.f32.partialorder %v893, 8.507059e+37
    %v895 = vand.u32 %v882, 2147483648
    %v896 = vor.u32 1.1754944e-38, %v895
    %v897 = vsel %vm894, %v896, %v892
    %v898 = vmul.f32 %v880, %v897
    %v899 = vrcp.pop %v883
    %v900 = vmul.f32 %v883, %v899
    %v901 = vsub.f32 1.0, %v900
    %v902 = vmul.f32 %v899, %v901
    %v903 = vadd.f32 %v899, %v902
    %vm904 = vweird.f32 %v883
    %vm905 = vweird.f32 %v899
    %vm906 = vmor %vm904, %vm905
    %v907 = vsel %vm906, %v899, %v903
    %v908 = vand.u32 2147483647, %v883
    %vm909 = vcmp.eq.f32.partialorder %v908, 8.507059e+37
    %v910 = vand.u32 %v883, 2147483648
    %v911 = vor.u32 1.1754944e-38, %v910
    %v912 = vsel %vm909, %v911, %v907
    %v913 = vmul.f32 %v881, %v912
    %v914 = vstv %s42
    %v915 = vadd.f32 %v898, %v914
    %v916 = vadd.f32 %v913, %v914
    %v917 = vld [vmem:[%s3 + $0x8] sm:$0xff]
    %v918 = vld [vmem:[%s3 + $0x18] sm:$0xff]
    %v919 = vld [vmem:[%s3 + $0x28] sm:$0xff]
    %v920 = vld [vmem:[%s3 + $0x38] sm:$0xff]
    %v921 = vld [vmem:[%s4 + $0x1] sm:$0x1]
    %v923 = vperm.slane %v921, 0
    %v926 = vsel %vm43, %v915, 0
    %v929 = vsel %vm43, %v916, 0
    %931 = vmatpush.msra.mxu0 0.0
    %932 = vmatpush.msra.mxu0 0.0
    %933 = vmatpush.msra.mxu0 0.0
    %934 = vmatpush.msra.mxu0 0.0
    %935 = vmatpush.msra.mxu0 0.0
    %936 = vmatpush.msra.mxu0 0.0
    %937 = vmatpush.msra.mxu0 0.0
    %938 = vmatpush.msra.mxu0 0.0
    %939 = vmatpush.msra.mxu0 0.0
    %940 = vmatpush.msra.mxu0 0.0
    %941 = vmatpush.msra.mxu0 0.0
    %942 = vmatpush.msra.mxu0 0.0
    %943 = vmatpush.msra.mxu0 %v920
    %944 = vmatpush.msra.mxu0 %v919
    %945 = vmatpush.msra.mxu0 %v918
    %946 = vmatpush.msra.mxu0 %v917
    %947 = vmatmul.f32.gmra.mxu0 %v926
    %v948 = vpop.f32.mrf.mxu0
    %v949 = vadd.f32 %v923, %v948
    %950 = vmatmul.f32.gmra.mxu0 %v929
    %v951 = vpop.f32.mrf.mxu0
    %v952 = vadd.f32 %v923, %v951
    %953 = vdwg.mxu0
    %v954 = vmax.f32 %v949, 0.0
    %v955 = vmax.f32 %v952, 0.0
    %v956 = vld [vmem:[%s5] sm:$0xff]
    %v957 = vld [vmem:[%s5 + $0x8] sm:$0xff]
    %v958 = vld [vmem:[%s5 + $0x10] sm:$0xff]
    %v959 = vld [vmem:[%s5 + $0x18] sm:$0xff]
    %v960 = vld [vmem:[%s5 + $0x20] sm:$0xff]
    %v961 = vld [vmem:[%s5 + $0x28] sm:$0xff]
    %v962 = vld [vmem:[%s5 + $0x30] sm:$0xff]
    %v963 = vld [vmem:[%s5 + $0x38] sm:$0xff]
    %964 = vrot.lane.b32.xlu0 %v923, 64
    %v965 = vpop.permute.xlu0 %964
    %vm967 = vcmask 523264
    %v969 = vsel %vm967, %v954, 0
    %v972 = vsel %vm967, %v955, 0
    %974 = vmatpush.msra.mxu0 0.0
    %975 = vmatpush.msra.mxu0 0.0
    %976 = vmatpush.msra.mxu0 0.0
    %977 = vmatpush.msra.mxu0 0.0
    %978 = vmatpush.msra.mxu0 0.0
    %979 = vmatpush.msra.mxu0 0.0
    %980 = vmatpush.msra.mxu0 0.0
    %981 = vmatpush.msra.mxu0 0.0
    %982 = vmatpush.msra.mxu0 %v963
    %983 = vmatpush.msra.mxu0 %v962
    %984 = vmatpush.msra.mxu0 %v961
    %985 = vmatpush.msra.mxu0 %v960
    %986 = vmatpush.msra.mxu0 %v959
    %987 = vmatpush.msra.mxu0 %v958
    %988 = vmatpush.msra.mxu0 %v957
    %989 = vmatpush.msra.mxu0 %v956
    %990 = vmatmul.f32.gmra.mxu0 %v969
    %v991 = vpop.f32.mrf.mxu0
    %v992 = vadd.f32 %v965, %v991
    %993 = vmatmul.f32.gmra.mxu0 %v972
    %v994 = vpop.f32.mrf.mxu0
    %v995 = vadd.f32 %v965, %v994
    %996 = vdwg.mxu0
    %v997 = vadd.f32 %v833, %v992
    %v998 = vadd.f32 %v834, %v995
    %999 = vst.msk [vmem:[#allocation5] sm:$0xff] %vm43, %v997
    %1000 = vst.msk [vmem:[#allocation5 + $0x8] sm:$0xff] %vm43, %v998
    // Predicated region
    $region30: #{tpu_custom_call.1} parent=1 // pred_check
      _
    $region31: #{tpu_custom_call.1} parent=1 // pred_check_branch
      %1002 = sbr.rel (0) target = $region33
    $region32: #{tpu_custom_call.1} parent=1 // pred_region
      %1004 = vsyncadd [#allocation3], 0
      %s1005 = sshll.u32 [#allocation5], 4
      %s1006 = int_to_ptr.vmem [resolvable:$true] %s1005
      %s1007 = sshll.u32 %s6, 4
      %s1008 = int_to_ptr.hbm [resolvable:$true] %s1007
      %1013 = dma.vmem_to_hbm [thread:$0]  %s1006, 256, %s1008, [#allocation3], 128, 128, 8
    $region33: #{tpu_custom_call.1} parent=1 // pred_fallthru
      _
    // Predicated region
    $region34: #{tpu_custom_call.1} parent=1 // pred_check
      _
    $region35: #{tpu_custom_call.1} parent=1 // pred_check_branch
      %1015 = sbr.rel (0) target = $region37
    $region36: #{tpu_custom_call.1} parent=1 // pred_region
      %1017 = dma.done [#allocation3], 256
    $region37: #{tpu_custom_call.1} parent=1 // pred_fallthru
      _
    %1018 = vsyncpa [#allocation3], 1
    %1019 = vsyncpa [#allocation4], 1

</llo_original>
